<compile_context>
chip_gen: v6e
topology: v6e:2x2x1
jax: 0.10.0
libtpu: 0.0.40
codegen_flags: <defaults>
</compile_context>

<pallas_src>
import functools

import jax
import jax.numpy as jnp
from jax.experimental import pallas as pl
from jax.experimental.pallas import tpu as pltpu


_MAX_BLOCK_S = 4096                 # rows per grid step (multiple of 8)
_VMEM_BUDGET = 16 * 1024 * 1024     # budget for the two double-buffered output blocks


def _round_up(x, m):
    return (x + m - 1) // m * m


# ----------------------------- fused sincos ---------------------------------
_TWO_OVER_PI = 0.6366197723675814
# pi/2 split for Cody-Waite range reduction (cephes sinf/cosf constants x2).
_PIO2_A = 1.5703125
_PIO2_B = 4.837512969970703125e-4
_PIO2_C = 7.54978995489188e-8
# cephes minimax coefficients on [-pi/4, pi/4]
_S1, _S2, _S3 = -1.6666654611e-1, 8.3321608736e-3, -1.9515295891e-4
_C1, _C2, _C3 = 4.166664568298827e-2, -1.388731625493765e-3, 2.443315711809948e-5


def _sincos(x):
    """Fused (cos, sin) for x >= 0: one shared range reduction + quadrant select."""
    f = jnp.float32
    n = jnp.floor(x * f(_TWO_OVER_PI) + f(0.5))     # nearest multiple of pi/2 (x >= 0)
    q = n.astype(jnp.int32)
    r = x - n * f(_PIO2_A)
    r = r - n * f(_PIO2_B)
    r = r - n * f(_PIO2_C)                          # r in [-pi/4, pi/4]

    z = r * r
    s_poly = ((f(_S3) * z + f(_S2)) * z + f(_S1)) * (z * r) + r
    c_poly = ((f(_C3) * z + f(_C2)) * z + f(_C1)) * (z * z) + (f(1.0) - f(0.5) * z)

    swap = (q & 1) != 0
    sin_v = jnp.where(swap, c_poly, s_poly)
    cos_v = jnp.where(swap, s_poly, c_poly)
    sin_v = jnp.where((q & 2) != 0, -sin_v, sin_v)
    cos_v = jnp.where(((q + 1) & 2) != 0, -cos_v, cos_v)
    return cos_v, sin_v


# ------------------------------- kernel --------------------------------------
def _rope_table_kernel(inv_freq_ref, cos_ref, sin_ref, *, scaling_factor):
    """Write one (block_s, dim) tile of the cos table and one of the sin table."""
    block_s, dim = cos_ref.shape
    cw = inv_freq_ref.shape[-1]       # compute width: dim (dim < 256) or dim // 2

    row0 = pl.program_id(0) * block_s
    pos = jax.lax.broadcasted_iota(jnp.int32, (block_s, cw), 0) + row0
    # exact for power-of-two scaling factors (default 8.0)
    t = pos.astype(jnp.float32) * jnp.float32(1.0 / scaling_factor)
    freqs = t * inv_freq_ref[...]                     # (block_s, cw)
    c, s = _sincos(freqs)
    c = c.astype(cos_ref.dtype)
    s = s.astype(sin_ref.dtype)

    if cw == dim:
        # full-width compute: two dense stores
        cos_ref[...] = c
        sin_ref[...] = s
    else:
        # half-width compute (half >= 128): duplicate on lane-aligned stores
        half = cw
        cos_ref[:, :half] = c
        cos_ref[:, half:] = c
        sin_ref[:, :half] = s
        sin_ref[:, half:] = s


# ------------------------------- wrapper --------------------------------------
def rotary_positional_embedding(x, seq_len, *, dim, theta=500000.0,
                                scaling_factor=8.0, out_dtype=jnp.float32):
    """Returns (cos, sin), each of shape (1, seq_len, 1, dim)."""
    del x  # only used for device placement in the PyTorch module
    half = dim // 2

    # Identical formulation to the reference (bit-parity of inv_freq).
    inv_freq = 1.0 / (theta ** (jnp.arange(0, dim, 2, dtype=jnp.float32) / dim))
    if half >= 128:
        cw = half
        inv_freq_in = inv_freq.reshape(1, half)
    else:
        cw = dim
        inv_freq_in = jnp.concatenate([inv_freq, inv_freq]).reshape(1, dim)

    itemsize = jnp.dtype(out_dtype).itemsize
    row_bytes = 2 * 2 * dim * itemsize           # 2 outputs x double-buffered
    cap = max(8, (_VMEM_BUDGET // row_bytes) // 8 * 8)
    if seq_len <= 8:
        block_s = seq_len                        # full extent (legal even if < 8)
    else:
        # >= 2 grid steps so v7x megacore can shard the seq axis; big tiles
        # amortize per-step overhead on v5e/v6e.
        block_s = min(_MAX_BLOCK_S, cap, _round_up(pl.cdiv(seq_len, 2), 8))
    grid = (pl.cdiv(seq_len, block_s),)

    kernel = functools.partial(_rope_table_kernel, scaling_factor=scaling_factor)

    cos2d, sin2d = pl.pallas_call(
        kernel,
        out_shape=(jax.ShapeDtypeStruct((seq_len, dim), out_dtype),
                   jax.ShapeDtypeStruct((seq_len, dim), out_dtype)),
        grid=grid,
        in_specs=[pl.BlockSpec((1, cw), lambda i: (0, 0))],
        out_specs=[pl.BlockSpec((block_s, dim), lambda i: (i, 0)),
                   pl.BlockSpec((block_s, dim), lambda i: (i, 0))],
        compiler_params=pltpu.CompilerParams(
            dimension_semantics=("parallel",)),
        cost_estimate=pl.CostEstimate(
            flops=int(30 * seq_len * cw),
            transcendentals=0,
            bytes_accessed=int(2 * seq_len * dim * itemsize + cw * 4)),
    )(inv_freq_in)

    # free expand_dims to the PyTorch layout (1, seq_len, 1, dim)
    return cos2d[None, :, None, :], sin2d[None, :, None, :]


def _reference(seq_len, dim, theta=500000.0, scaling_factor=8.0):
    inv_freq = 1.0 / (theta ** (jnp.arange(0, dim, 2, dtype=jnp.float32) / dim))
    t = jnp.arange(seq_len, dtype=jnp.float32) / scaling_factor
    freqs = jnp.outer(t, inv_freq)
    emb = jnp.concatenate([freqs, freqs], axis=-1)
    return jnp.cos(emb)[None, :, None, :], jnp.sin(emb)[None, :, None, :]


if __name__ == "__main__":
    key = jax.random.PRNGKey(0)
    batch, seq_len, heads, dim = 2, 8, 4, 32
    # x is shape/device-only in the original forward; build it anyway for fidelity.
    x = jax.random.normal(key, (batch, seq_len, heads, dim), dtype=jnp.float32)

    cos, sin = rotary_positional_embedding(x, seq_len, dim=dim)
    cos, sin = jax.block_until_ready((cos, sin))

    cos_ref, sin_ref = _reference(seq_len, dim)
    assert cos.shape == (1, seq_len, 1, dim) and sin.shape == (1, seq_len, 1, dim)
    assert jnp.allclose(cos, cos_ref, atol=1e-5, rtol=1e-5)
    assert jnp.allclose(sin, sin_ref, atol=1e-5, rtol=1e-5)

    # Exercise the multi-block (grid > 1) path as well.
    seq_len2, dim2 = 192, 64
    cos2, sin2 = rotary_positional_embedding(x, seq_len2, dim=dim2)
    cos2, sin2 = jax.block_until_ready((cos2, sin2))
    cos2_ref, sin2_ref = _reference(seq_len2, dim2)
    assert cos2.shape == (1, seq_len2, 1, dim2)
    assert jnp.allclose(cos2, cos2_ref, atol=1e-5, rtol=1e-5)
    assert jnp.allclose(sin2, sin2_ref, atol=1e-5, rtol=1e-5)

    print("KERNEL_OK")
</pallas_src>

<mosaic_0001>
module attributes {stable_mosaic.version = 11 : i64} {
  func.func @_rope_table_kernel(%arg0: i32, %arg1: memref<1x32xf32, #tpu.memory_space<vmem>>, %arg2: memref<8x32xf32, #tpu.memory_space<vmem>>, %arg3: memref<8x32xf32, #tpu.memory_space<vmem>>) attributes {dimension_semantics = [#tpu.dimension_semantics<parallel>], iteration_bounds = array<i64: 1>, scalar_prefetch = 0 : i64, scratch_operands = 0 : i64, tpu.core_type = #tpu.core_type<tc>, window_params = [{pipeline_mode = #tpu.pipeline_mode<synchronous>, transform_indices = @transform_0, window_bounds = array<i64: 1, 32>}, {transform_indices = @transform_1, window_bounds = array<i64: 8, 32>}, {transform_indices = @transform_2, window_bounds = array<i64: 8, 32>}]} {
    %c8_i32 = arith.constant 8 : i32
    %0 = arith.muli %arg0, %c8_i32 : i32
    %1 = tpu.iota {dimensions = array<i32: 0>} : vector<8x32xi32>
    %2 = vector.broadcast %0 : i32 to vector<8x32xi32>
    %3 = arith.addi %1, %2 : vector<8x32xi32>
    %4 = arith.sitofp %3 : vector<8x32xi32> to vector<8x32xf32>
    %cst = arith.constant 1.250000e-01 : f32
    %5 = vector.broadcast %cst : f32 to vector<8x32xf32>
    %6 = arith.mulf %4, %5 : vector<8x32xf32>
    %c0 = arith.constant 0 : index
    %c0_0 = arith.constant 0 : index
    %7 = vector.load %arg1[%c0, %c0_0] : memref<1x32xf32, #tpu.memory_space<vmem>>, vector<1x32xf32>
    %8 = vector.broadcast %7 : vector<1x32xf32> to vector<8x32xf32>
    %9 = arith.mulf %6, %8 : vector<8x32xf32>
    %cst_1 = arith.constant 0.636619746 : f32
    %10 = vector.broadcast %cst_1 : f32 to vector<8x32xf32>
    %11 = arith.mulf %9, %10 : vector<8x32xf32>
    %cst_2 = arith.constant 5.000000e-01 : f32
    %12 = vector.broadcast %cst_2 : f32 to vector<8x32xf32>
    %13 = arith.addf %11, %12 : vector<8x32xf32>
    %14 = math.floor %13 : vector<8x32xf32>
    %15 = arith.fptosi %14 : vector<8x32xf32> to vector<8x32xi32>
    %cst_3 = arith.constant 1.5703125 : f32
    %16 = vector.broadcast %cst_3 : f32 to vector<8x32xf32>
    %17 = arith.mulf %14, %16 : vector<8x32xf32>
    %18 = arith.subf %9, %17 : vector<8x32xf32>
    %cst_4 = arith.constant 4.83751297E-4 : f32
    %19 = vector.broadcast %cst_4 : f32 to vector<8x32xf32>
    %20 = arith.mulf %14, %19 : vector<8x32xf32>
    %21 = arith.subf %18, %20 : vector<8x32xf32>
    %cst_5 = arith.constant 7.549790e-08 : f32
    %22 = vector.broadcast %cst_5 : f32 to vector<8x32xf32>
    %23 = arith.mulf %14, %22 : vector<8x32xf32>
    %24 = arith.subf %21, %23 : vector<8x32xf32>
    %25 = arith.mulf %24, %24 : vector<8x32xf32>
    %cst_6 = arith.constant -1.95152956E-4 : f32
    %26 = vector.broadcast %cst_6 : f32 to vector<8x32xf32>
    %27 = arith.mulf %26, %25 : vector<8x32xf32>
    %cst_7 = arith.constant 0.00833216123 : f32
    %28 = vector.broadcast %cst_7 : f32 to vector<8x32xf32>
    %29 = arith.addf %27, %28 : vector<8x32xf32>
    %30 = arith.mulf %29, %25 : vector<8x32xf32>
    %cst_8 = arith.constant -0.166666552 : f32
    %31 = vector.broadcast %cst_8 : f32 to vector<8x32xf32>
    %32 = arith.addf %30, %31 : vector<8x32xf32>
    %33 = arith.mulf %25, %24 : vector<8x32xf32>
    %34 = arith.mulf %32, %33 : vector<8x32xf32>
    %35 = arith.addf %34, %24 : vector<8x32xf32>
    %cst_9 = arith.constant 2.44331568E-5 : f32
    %36 = vector.broadcast %cst_9 : f32 to vector<8x32xf32>
    %37 = arith.mulf %36, %25 : vector<8x32xf32>
    %cst_10 = arith.constant -0.00138873165 : f32
    %38 = vector.broadcast %cst_10 : f32 to vector<8x32xf32>
    %39 = arith.addf %37, %38 : vector<8x32xf32>
    %40 = arith.mulf %39, %25 : vector<8x32xf32>
    %cst_11 = arith.constant 0.0416666456 : f32
    %41 = vector.broadcast %cst_11 : f32 to vector<8x32xf32>
    %42 = arith.addf %40, %41 : vector<8x32xf32>
    %43 = arith.mulf %25, %25 : vector<8x32xf32>
    %44 = arith.mulf %42, %43 : vector<8x32xf32>
    %cst_12 = arith.constant 5.000000e-01 : f32
    %45 = vector.broadcast %cst_12 : f32 to vector<8x32xf32>
    %46 = arith.mulf %45, %25 : vector<8x32xf32>
    %cst_13 = arith.constant 1.000000e+00 : f32
    %47 = vector.broadcast %cst_13 : f32 to vector<8x32xf32>
    %48 = arith.subf %47, %46 : vector<8x32xf32>
    %49 = arith.addf %44, %48 : vector<8x32xf32>
    %c1_i32 = arith.constant 1 : i32
    %50 = vector.broadcast %c1_i32 : i32 to vector<8x32xi32>
    %51 = arith.andi %15, %50 : vector<8x32xi32>
    %c0_i32 = arith.constant 0 : i32
    %52 = vector.broadcast %c0_i32 : i32 to vector<8x32xi32>
    %53 = arith.cmpi ne, %51, %52 : vector<8x32xi32>
    %54 = arith.select %53, %49, %35 : vector<8x32xi1>, vector<8x32xf32>
    %55 = arith.select %53, %35, %49 : vector<8x32xi1>, vector<8x32xf32>
    %c2_i32 = arith.constant 2 : i32
    %56 = vector.broadcast %c2_i32 : i32 to vector<8x32xi32>
    %57 = arith.andi %15, %56 : vector<8x32xi32>
    %c0_i32_14 = arith.constant 0 : i32
    %58 = vector.broadcast %c0_i32_14 : i32 to vector<8x32xi32>
    %59 = arith.cmpi ne, %57, %58 : vector<8x32xi32>
    %cst_15 = arith.constant 0.000000e+00 : f32
    %60 = vector.broadcast %cst_15 : f32 to vector<8x32xf32>
    %61 = arith.subf %60, %54 : vector<8x32xf32>
    %62 = arith.select %59, %61, %54 : vector<8x32xi1>, vector<8x32xf32>
    %c1_i32_16 = arith.constant 1 : i32
    %63 = vector.broadcast %c1_i32_16 : i32 to vector<8x32xi32>
    %64 = arith.addi %15, %63 : vector<8x32xi32>
    %c2_i32_17 = arith.constant 2 : i32
    %65 = vector.broadcast %c2_i32_17 : i32 to vector<8x32xi32>
    %66 = arith.andi %64, %65 : vector<8x32xi32>
    %c0_i32_18 = arith.constant 0 : i32
    %67 = vector.broadcast %c0_i32_18 : i32 to vector<8x32xi32>
    %68 = arith.cmpi ne, %66, %67 : vector<8x32xi32>
    %cst_19 = arith.constant 0.000000e+00 : f32
    %69 = vector.broadcast %cst_19 : f32 to vector<8x32xf32>
    %70 = arith.subf %69, %55 : vector<8x32xf32>
    %71 = arith.select %68, %70, %55 : vector<8x32xi1>, vector<8x32xf32>
    %c0_20 = arith.constant 0 : index
    %c0_21 = arith.constant 0 : index
    %72 = vector.load %arg2[%c0_20, %c0_21] : memref<8x32xf32, #tpu.memory_space<vmem>>, vector<8x32xf32>
    tpu.vector_store %arg2[%c0_20, %c0_21], %71 {strides = array<i32>} : memref<8x32xf32, #tpu.memory_space<vmem>>, vector<8x32xf32>,
    %c0_22 = arith.constant 0 : index
    %c0_23 = arith.constant 0 : index
    %73 = vector.load %arg3[%c0_22, %c0_23] : memref<8x32xf32, #tpu.memory_space<vmem>>, vector<8x32xf32>
    tpu.vector_store %arg3[%c0_22, %c0_23], %62 {strides = array<i32>} : memref<8x32xf32, #tpu.memory_space<vmem>>, vector<8x32xf32>,
    return
  }
  func.func @transform_0(%arg0: i32) -> (i32, i32) {
    %c0_i32 = arith.constant 0 : i32
    %c0_i32_0 = arith.constant 0 : i32
    %c0_i32_1 = arith.constant 0 : i32
    return %c0_i32, %c0_i32_0 : i32, i32
  }
  func.func @transform_1(%arg0: i32) -> (i32, i32) {
    %c0_i32 = arith.constant 0 : i32
    %c0_i32_0 = arith.constant 0 : i32
    return %arg0, %c0_i32 : i32, i32
  }
  func.func @transform_2(%arg0: i32) -> (i32, i32) {
    %c0_i32 = arith.constant 0 : i32
    %c0_i32_0 = arith.constant 0 : i32
    return %arg0, %c0_i32 : i32, i32
  }
}

</mosaic_0001>

<llo_original>
// kernel: tpu_custom_call.1
$region0: #{tpu_custom_call.1}
  #allocation0 [shape = 'u32[]', space=smem, size = 0x4, offset = 0x4, fixed_abs, tag = 'smem constant byte address 0x4 - core index']
  #allocation1 [shape = 'u32[144,128]{1,0:T(1,128)}', space=vmem, size = 0x12000, scoped, tag = 'internal scratch']
  %s0 = inlined_call_operand.hbm [shape: f32[1,32], index: 0, kind: input, shape index: {}]
  %s1 = inlined_call_operand.hbm [shape: f32[8,32], index: 1, kind: output, shape index: {0}]
  %s2 = inlined_call_operand.hbm [shape: f32[8,32], index: 2, kind: output, shape index: {1}]
  %3 = xla_tuple %s1, %s2
  %s4 = sld [smem:[#allocation0]]
  $region26: #{tpu_custom_call.1} parent=0
    _
  %s6 = ssub.s32 1, %s4
  %s7 = scalar_select 0, %s6, %s4
  $region1: #{tpu_custom_call.1} parent=0
    #allocation2 [shape = 'u8[512]{0}', space=vmem, size = 0x400, scoped, tag = 'input window, operand 0, single buffered']
    #allocation3 [shape = 's32[1]{0}', space=sflag, size = 0x4, scoped, tag = 'scoped memory for tpu_custom_call.1']
    #allocation4 [shape = 's32[1]{0}', space=sflag, size = 0x4, scoped, tag = 'scoped memory for tpu_custom_call.1']
    #allocation5 [shape = 'u8[4096]{0}', space=vmem, size = 0x1000, scoped, tag = 'output window, operand 0, single buffered']
    #allocation6 [shape = 'u8[4096]{0}', space=vmem, size = 0x1000, scoped, tag = 'output window, operand 1, single buffered']
    #allocation7 [shape = 's32[1]{0}', space=sflag, size = 0x4, scoped, tag = 'scoped memory for tpu_custom_call.1']
    %8 = vsyncpa [#allocation3], 0
    %9 = vsyncpa [#allocation4], 0
    %10 = vsyncpa [#allocation7], 0
    // Predicated region
    $region2: #{tpu_custom_call.1} parent=1 // pred_check
      _
    $region3: #{tpu_custom_call.1} parent=1 // pred_check_branch
      %12 = sbr.rel (0) target = $region5
    $region4: #{tpu_custom_call.1} parent=1 // pred_region
      %s14 = ssub.s32 16, 16
      %15 = vsyncadd [#allocation3], %s14
      %s17 = sshll.u32 [#allocation2], 4
      %s18 = int_to_ptr.vmem [resolvable:$true] %s17
      %20 = dma.hbm_to_vmem [thread:$0]  %s0, 16, %s18, [#allocation3]
    $region5: #{tpu_custom_call.1} parent=1 // pred_fallthru
      _
    // Predicated region
    $region6: #{tpu_custom_call.1} parent=1 // pred_check
      _
    $region7: #{tpu_custom_call.1} parent=1 // pred_check_branch
      %22 = sbr.rel (0) target = $region9
    $region8: #{tpu_custom_call.1} parent=1 // pred_region
      %23 = dma.done [#allocation3], 16
    $region9: #{tpu_custom_call.1} parent=1 // pred_fallthru
      _
    %s24 = smul.u32 0, 8
    %v25 = vlaneseq
    %v26 = vshrl.u32 %v25, 7
    %v27 = vstv %s24
    %v28 = vadd.s32 %v26, %v27
    %v29 = vcvt.s32.f32 %v28
    %v30 = vmul.f32 %v29, 0.125
    %v31 = vld [vmem:[#allocation2] sm:$0x1]
    %v33 = vlaneseq
    %v34 = vshrl.u32 %v33, 7
    %v35 = vsub.s32 0, %v34
    %v36 = vrot.slane %v31, %v35
    %v38 = vmul.f32 %v30, %v36
    %v39 = vmul.f32 %v38, 0.63661975
    %v40 = vadd.f32 %v39, 0.5
    %v41 = vfloor.f32 %v40
    %v42 = vcvt.f32.s32.to.zero.pseudo %v41
    %v43 = vmul.f32 %v41, 1.5703125
    %v44 = vsub.f32 %v38, %v43
    %v45 = vmul.f32 %v41, 0.0004837513
    %v46 = vsub.f32 %v44, %v45
    %v47 = vmul.f32 %v41, 7.54979e-08
    %v48 = vsub.f32 %v46, %v47
    %v49 = vmul.f32 %v48, %v48
    %v50 = vmul.f32 %v49, -0.00019515296
    %v51 = vadd.f32 %v50, 0.008332161
    %v52 = vmul.f32 %v51, %v49
    %v53 = vadd.f32 %v52, -0.16666655
    %v54 = vmul.f32 %v49, %v48
    %v55 = vmul.f32 %v53, %v54
    %v56 = vadd.f32 %v55, %v48
    %v57 = vmul.f32 %v49, 2.4433157e-05
    %v58 = vadd.f32 %v57, -0.0013887316
    %v59 = vmul.f32 %v58, %v49
    %v60 = vadd.f32 %v59, 0.041666646
    %v61 = vmul.f32 %v49, %v49
    %v62 = vmul.f32 %v60, %v61
    %v63 = vmul.f32 %v49, 0.5
    %v64 = vsub.f32 1.0, %v63
    %v65 = vadd.f32 %v62, %v64
    %v66 = vand.u32 %v42, 1
    %vm67 = vcmp.ne.s32.totalorder %v66, 0
    %v68 = vsel %vm67, %v65, %v56
    %v69 = vsel %vm67, %v56, %v65
    %v70 = vand.u32 %v42, 2
    %vm71 = vcmp.ne.s32.totalorder %v70, 0
    %v72 = vsub.f32 0.0, %v68
    %v73 = vsel %vm71, %v72, %v68
    %v74 = vadd.s32 %v42, 1
    %v75 = vand.u32 %v74, 2
    %vm76 = vcmp.ne.s32.totalorder %v75, 0
    %v77 = vsub.f32 0.0, %v69
    %v78 = vsel %vm76, %v77, %v69
    %vm79 = vcmask 261120
    %80 = vst.msk [vmem:[#allocation5] sm:$0xff] %vm79, %v78
    %81 = vst.msk [vmem:[#allocation6] sm:$0xff] %vm79, %v73
    // Predicated region
    $region10: #{tpu_custom_call.1} parent=1 // pred_check
      _
    $region11: #{tpu_custom_call.1} parent=1 // pred_check_branch
      %83 = sbr.rel (0) target = $region13
    $region12: #{tpu_custom_call.1} parent=1 // pred_region
      %s85 = ssub.s32 128, 128
      %86 = vsyncadd [#allocation4], %s85
      %s88 = sshll.u32 [#allocation5], 4
      %s89 = int_to_ptr.vmem [resolvable:$true] %s88
      %91 = dma.vmem_to_hbm [thread:$0]  %s89, 128, %s1, [#allocation4]
    $region13: #{tpu_custom_call.1} parent=1 // pred_fallthru
      _
    // Predicated region
    $region14: #{tpu_custom_call.1} parent=1 // pred_check
      _
    $region15: #{tpu_custom_call.1} parent=1 // pred_check_branch
      %93 = sbr.rel (0) target = $region17
    $region16: #{tpu_custom_call.1} parent=1 // pred_region
      %s95 = ssub.s32 128, 128
      %96 = vsyncadd [#allocation7], %s95
      %s98 = sshll.u32 [#allocation6], 4
      %s99 = int_to_ptr.vmem [resolvable:$true] %s98
      %101 = dma.vmem_to_hbm [thread:$0]  %s99, 128, %s2, [#allocation7]
    $region17: #{tpu_custom_call.1} parent=1 // pred_fallthru
      _
    // Predicated region
    $region18: #{tpu_custom_call.1} parent=1 // pred_check
      _
    $region19: #{tpu_custom_call.1} parent=1 // pred_check_branch
      %103 = sbr.rel (0) target = $region21
    $region20: #{tpu_custom_call.1} parent=1 // pred_region
      %104 = dma.done [#allocation4], 128
    $region21: #{tpu_custom_call.1} parent=1 // pred_fallthru
      _
    // Predicated region
    $region22: #{tpu_custom_call.1} parent=1 // pred_check
      _
    $region23: #{tpu_custom_call.1} parent=1 // pred_check_branch
      %106 = sbr.rel (0) target = $region25
    $region24: #{tpu_custom_call.1} parent=1 // pred_region
      %107 = dma.done [#allocation7], 128
    $region25: #{tpu_custom_call.1} parent=1 // pred_fallthru
      _
    %108 = vsyncpa [#allocation3], 1
    %109 = vsyncpa [#allocation4], 1
    %110 = vsyncpa [#allocation7], 1

</llo_original>
